<compile_context>
chip_gen: v7x
topology: tpu7x:2x2x1
jax: 0.10.0
libtpu: 0.0.40
codegen_flags: <defaults>
</compile_context>

<pallas_src>
import functools
import re
import numpy as np
import jax
import jax.numpy as jnp
from jax.experimental import pallas as pl
from jax.experimental.pallas import tpu as pltpu


_DTYPES = {
    "int8": jnp.int8,
    "int16": jnp.int16,
    "int32": jnp.int32,
    "bfloat16": jnp.bfloat16,
    "float32": jnp.float32,
}
_ITEMSIZE = {"int8": 1, "int16": 2, "int32": 4, "bfloat16": 2, "float32": 4}


def _round_up(v, m):
    return ((v + m - 1) // m) * m


def _next_pow2(v):
    return 1 << (int(v) - 1).bit_length() if v > 1 else 1


def _pad_nodes(n):
    """Padded node count so the chosen tiles divide it exactly."""
    if n <= 128:
        return 128
    if n <= 256:
        return 256
    return _round_up(n, 512)


def _tpu_generation():
    """Best-effort TPU generation from device_kind ('TPU v5e' -> 5, ...)."""
    try:
        kind = jax.devices()[0].device_kind.lower()
    except Exception:
        return None
    m = re.search(r"(\d+)", kind)
    return int(m.group(1)) if m else None


@functools.lru_cache(maxsize=None)
def _int8_mxu_ok():
    """Probe: does int8 x int8 -> int32 MXU matmul lower and run on this chip?"""
    def k(a_ref, b_ref, o_ref):
        o_ref[...] = jnp.dot(a_ref[...], b_ref[...],
                             preferred_element_type=jnp.int32)
    try:
        f = pl.pallas_call(
            k, out_shape=jax.ShapeDtypeStruct((128, 128), jnp.int32))
        a = jnp.ones((128, 128), jnp.int8)
        r = jax.block_until_ready(f(a, a))
        return bool(np.asarray(r)[0, 0] == 128)
    except Exception:
        return False


@functools.lru_cache(maxsize=None)
def _int16_out_ok():
    """Probe: do int16 casts/stores lower and run on this chip?"""
    def k(x_ref, o_ref):
        o_ref[...] = x_ref[...].astype(jnp.int32).astype(jnp.int16)
    try:
        f = pl.pallas_call(
            k, out_shape=jax.ShapeDtypeStruct((128, 128), jnp.int16))
        r = jax.block_until_ready(f(jnp.full((128, 128), 7.0, jnp.float32)))
        return bool(np.asarray(r)[0, 0] == 7)
    except Exception:
        return False


def _vmem_bytes(Np, tm, tn, tk, a_bytes, out_bytes):
    a = tm * tk * a_bytes * 2       # double-buffered adjacency tile
    o = tm * tn * out_bytes * 2     # double-buffered output tile
    acc = tm * tn * 4               # accumulator scratch
    lbl = Np * 128 * 4 * 2          # resident (Np,1) labels, lane-padded
    return a + o + acc + lbl


def _select_tiles(Np, Mp, a_bytes, out_bytes, budget, megacore):
    tm = min(512, Np)
    tk = Np if Np <= 1024 else (1024 if Np % 1024 == 0 else 512)
    # Widen tn toward Mp so the adjacency is read from HBM only once per
    # WL iteration; back off only if VMEM would overflow.
    tn = Mp
    while tn > 128 and _vmem_bytes(Np, tm, tn, tk, a_bytes, out_bytes) > budget:
        tn //= 2
    while tm > 128 and _vmem_bytes(Np, tm, tn, tk, a_bytes, out_bytes) > budget:
        tm //= 2
    # v7x megacore: guarantee >= 2 steps on the parallel axes so the two
    # TensorCores both get work.
    if megacore and (Np // tm) * (Mp // tn) < 2 and tm > 128:
        tm //= 2
    return tm, tn, tk


@functools.lru_cache(maxsize=None)
def _build_hist_call(Np, Mp, tm, tn, tk, a_name, acc_name, out_name, vmem_limit):
    """Cached, jitted pallas_call for one padded problem size / dtype combo."""
    a_dt = _DTYPES[a_name]
    acc_dt = _DTYPES[acc_name]
    out_dt = _DTYPES[out_name]
    grid = (Np // tm, Mp // tn, Np // tk)

    def kernel(a_ref, lbl_ref, out_ref, acc_ref):
        # a_ref:   [tm, tk]  adjacency tile (dst-major), int8/bf16/f32
        # lbl_ref: [Np, 1]   resident source-node colors (-1 = padded)
        # out_ref: [tm, tn]  neighbor-color histogram tile (int16/int32)
        # acc_ref: [tm, tn]  accumulator scratch (int32 or f32)
        k = pl.program_id(2)

        @pl.when(k == 0)
        def _init():
            acc_ref[...] = jnp.zeros_like(acc_ref)

        # Slice the resident label vector in-kernel (no per-step DMA).
        start = pl.multiple_of(k * tk, tk)
        col_base = pl.program_id(1) * tn
        # Shift the tiny [tk,1] colors, not the [tk,tn] iota (VPU saver).
        colors = lbl_ref[pl.ds(start, tk), :] - col_base          # [tk, 1]
        lane = jax.lax.broadcasted_iota(jnp.int32, (tk, tn), 1)   # [tk, tn]
        onehot = (colors == lane).astype(a_dt)   # padded (-1) never matches

        acc_ref[...] += jnp.dot(a_ref[...], onehot,
                                preferred_element_type=acc_dt)

        @pl.when(k == pl.num_programs(2) - 1)
        def _finalize():
            # Counts are exact integers in the accumulator; emit narrow ints.
            out_ref[...] = acc_ref[...].astype(jnp.int32).astype(out_dt)

    call = pl.pallas_call(
        kernel,
        out_shape=jax.ShapeDtypeStruct((Np, Mp), out_dt),
        grid=grid,
        in_specs=[
            pl.BlockSpec((tm, tk), lambda i, j, k: (i, k)),   # adjacency tile
            pl.BlockSpec((Np, 1), lambda i, j, k: (0, 0)),    # resident labels
        ],
        out_specs=pl.BlockSpec((tm, tn), lambda i, j, k: (i, j)),
        scratch_shapes=[pltpu.VMEM((tm, tn), acc_dt)],
        compiler_params=pltpu.CompilerParams(
            dimension_semantics=("parallel", "parallel", "arbitrary"),
            vmem_limit_bytes=int(vmem_limit)),
    )
    return jax.jit(call)


def wl_neighbor_histogram(adj_pad, labels, num_colors, N,
                          a_name, acc_name, out_name, gen):
    """adj_pad: [Np,Np] (already cast); labels: [N] -> [N,num_colors] counts."""
    Np = adj_pad.shape[0]
    # Bucket the color range to a power of two (>= 128) so WL iterations with a
    # slowly growing color count reuse the same compiled kernel.
    Mp = max(128, _next_pow2(num_colors))
    a_bytes = _ITEMSIZE[a_name]
    out_bytes = _ITEMSIZE[out_name]

    # Per-chip VMEM budget: v7x has only 64 MiB physical; v5e/v6e have 128 MiB.
    small_vmem = (gen is None) or (gen >= 7)
    cap = (56 << 20) if small_vmem else (120 << 20)
    budget = cap - (8 << 20)
    tm, tn, tk = _select_tiles(Np, Mp, a_bytes, out_bytes, budget,
                               megacore=(gen is not None and gen >= 7))
    need = _vmem_bytes(Np, tm, tn, tk, a_bytes, out_bytes)
    vmem_limit = min(cap, max(need + (8 << 20), 32 << 20))

    lbl_pad = jnp.full((Np, 1), -1, jnp.int32).at[:N, 0].set(
        jnp.asarray(labels, jnp.int32))

    hist_fn = _build_hist_call(Np, Mp, tm, tn, tk,
                               a_name, acc_name, out_name, vmem_limit)
    hist = hist_fn(adj_pad, lbl_pad)
    return hist[:N, :num_colors]


class WL:
    """JAX/Pallas re-implementation of the PyTorch WL module (num_it x WLConv)."""

    def __init__(self, num_it):
        self.num_it = num_it
        self.hashmap = {}  # WLConv has no learned parameters, only this map.

    def reset_parameters(self):
        self.hashmap = {}

    def __call__(self, x, edge_index):
        x_np = np.asarray(x)
        if x_np.ndim > 1:
            # PyG asserts one-hot rows, then argmaxes to integer colors.
            assert np.all(x_np.sum(axis=-1) == 1)
            labels = x_np.argmax(axis=-1).astype(np.int64)
        else:
            labels = x_np.astype(np.int64)

        N = labels.shape[0]
        ei = np.asarray(edge_index).astype(np.int64).reshape(2, -1)
        Np = _pad_nodes(N)
        gen = _tpu_generation()

        # Host-side bounds that gate the narrow-dtype fast paths.
        if ei.shape[1] > 0:
            _, cnt = np.unique(ei.T, axis=0, return_counts=True)
            max_mult = int(cnt.max())                         # parallel edges
            max_deg = int(np.bincount(ei[1], minlength=N).max())
        else:
            max_mult, max_deg = 0, 0

        # Adjacency / accumulator dtypes per chip generation (probe-verified).
        if gen in (5, 6) and max_mult <= 127 and _int8_mxu_ok():
            a_name, acc_name = "int8", "int32"      # int MXU on v5e/v6e
        elif max_mult <= 256:
            a_name, acc_name = "bfloat16", "float32"  # exact for mult <= 256
        else:
            a_name, acc_name = "float32", "float32"   # exact for counts < 2^24
        out_name = "int16" if (max_deg < (1 << 15) and _int16_out_ok()) else "int32"

        # Build the padded adjacency ONCE (hoisted out of the WL loop):
        # exact int32 scatter-add, then a single cast to the MXU dtype.
        # A[dst, src] += 1 : neighbors of i are sources of edges into i.
        adj = jnp.zeros((Np, Np), jnp.int32).at[ei[1], ei[0]].add(1)
        adj = adj.astype(_DTYPES[a_name])

        for _ in range(self.num_it):
            num_colors = int(labels.max()) + 1
            hist = np.asarray(wl_neighbor_histogram(
                adj, labels, num_colors, N, a_name, acc_name, out_name, gen))

            # TODO(synk): the consecutive-integer relabeling uses a persistent,
            # data-dependent hashmap (Python dict) and is inherently sequential;
            # it stays on host while the neighbor aggregation runs on TPU.
            new_labels = np.empty(N, dtype=np.int64)
            color_range = np.arange(num_colors)
            for i in range(N):
                # PyG's signature: (own color, sorted neighbor colors).
                sig = (int(labels[i]),) + tuple(
                    np.repeat(color_range, hist[i]).tolist())
                if sig not in self.hashmap:
                    self.hashmap[sig] = len(self.hashmap)
                new_labels[i] = self.hashmap[sig]
            labels = new_labels

        # PyG returns torch.long; JAX default (x64 off) gives int32.
        return jnp.asarray(labels, dtype=jnp.int32)


if __name__ == "__main__":
    key = jax.random.PRNGKey(0)
    N, C = 8, 4
    k1, _ = jax.random.split(key)

    # One-hot node colors [N, C]
    labels0 = jax.random.randint(k1, (N,), 0, C)
    x = jax.nn.one_hot(labels0, C, dtype=jnp.float32)

    # Small undirected graph: ring over N nodes plus two chords (symmetric COO)
    ring = [(i, (i + 1) % N) for i in range(N)]
    chords = [(0, 4), (2, 6)]
    edges = []
    for a, b in ring + chords:
        edges.append((a, b))
        edges.append((b, a))
    edge_index = jnp.array(list(zip(*edges)), dtype=jnp.int32)  # [2, E]

    model = WL(num_it=3)
    out = model(x, edge_index)
    out = jax.block_until_ready(out)
    assert out.shape == (N,)
    print("KERNEL_OK")
</pallas_src>

<mosaic_0001>
module attributes {stable_mosaic.version = 11 : i64} {
  func.func @k(%arg0: memref<128x128xf32, #tpu.memory_space<vmem>>, %arg1: memref<128x128xi16, #tpu.memory_space<vmem>>) attributes {dimension_semantics = [], scalar_prefetch = 0 : i64, scratch_operands = 0 : i64, tpu.core_type = #tpu.core_type<tc>} {
    %c0 = arith.constant 0 : index
    %c0_0 = arith.constant 0 : index
    %0 = vector.load %arg0[%c0, %c0_0] : memref<128x128xf32, #tpu.memory_space<vmem>>, vector<128x128xf32>
    %1 = arith.fptosi %0 : vector<128x128xf32> to vector<128x128xi32>
    %2 = arith.trunci %1 : vector<128x128xi32> to vector<128x128xi16>
    %c0_1 = arith.constant 0 : index
    %c0_2 = arith.constant 0 : index
    %3 = vector.load %arg1[%c0_1, %c0_2] : memref<128x128xi16, #tpu.memory_space<vmem>>, vector<128x128xi16>
    tpu.vector_store %arg1[%c0_1, %c0_2], %2 {strides = array<i32>} : memref<128x128xi16, #tpu.memory_space<vmem>>, vector<128x128xi16>,
    return
  }
}

module attributes {stable_mosaic.version = 11 : i64} {
  func.func @kernel(%arg0: i32, %arg1: i32, %arg2: i32, %arg3: memref<128x128xbf16, #tpu.memory_space<vmem>>, %arg4: memref<128x1xi32, #tpu.memory_space<vmem>>, %arg5: memref<128x128xi32, #tpu.memory_space<vmem>>, %arg6: memref<128x128xf32, #tpu.memory_space<vmem>>) attributes {dimension_semantics = [#tpu.dimension_semantics<parallel>, #tpu.dimension_semantics<parallel>, #tpu.dimension_semantics<arbitrary>], iteration_bounds = array<i64: 1, 1, 1>, scalar_prefetch = 0 : i64, scratch_operands = 1 : i64, tpu.core_type = #tpu.core_type<tc>, window_params = [{transform_indices = @transform_0, window_bounds = array<i64: 128, 128>}, {pipeline_mode = #tpu.pipeline_mode<synchronous>, transform_indices = @transform_1, window_bounds = array<i64: 128, 1>}, {transform_indices = @transform_2, window_bounds = array<i64: 128, 128>}]} {
    %c0_i32 = arith.constant 0 : i32
    %0 = arith.cmpi eq, %arg2, %c0_i32 : i32
    %1 = arith.extui %0 : i1 to i32
    %c0_i32_0 = arith.constant 0 : i32
    %2 = arith.cmpi ne, %1, %c0_i32_0 : i32
    scf.if %2 {
      %cst_10 = arith.constant 0.000000e+00 : f32
      %24 = vector.broadcast %cst_10 : f32 to vector<128x128xf32>
      %c0_11 = arith.constant 0 : index
      %c0_12 = arith.constant 0 : index
      %25 = vector.load %arg6[%c0_11, %c0_12] : memref<128x128xf32, #tpu.memory_space<vmem>>, vector<128x128xf32>
      tpu.vector_store %arg6[%c0_11, %c0_12], %24 {strides = array<i32>} : memref<128x128xf32, #tpu.memory_space<vmem>>, vector<128x128xf32>,
    } else {
    }
    %c128_i32 = arith.constant 128 : i32
    %3 = arith.muli %arg2, %c128_i32 : i32
    %4 = tpu.assume_multiple %3, 128 : i32
    %c128_i32_1 = arith.constant 128 : i32
    %5 = arith.muli %arg1, %c128_i32_1 : i32
    %6 = arith.index_cast %4 : i32 to index
    %c0 = arith.constant 0 : index
    %7 = vector.load %arg4[%6, %c0] : memref<128x1xi32, #tpu.memory_space<vmem>>, vector<128x1xi32>
    %8 = vector.broadcast %5 : i32 to vector<128x1xi32>
    %9 = arith.subi %7, %8 : vector<128x1xi32>
    %10 = tpu.iota {dimensions = array<i32: 1>} : vector<128x128xi32>
    %11 = vector.broadcast %9 : vector<128x1xi32> to vector<128x128xi32>
    %12 = arith.cmpi eq, %11, %10 : vector<128x128xi32>
    %13 = arith.extui %12 : vector<128x128xi1> to vector<128x128xi32>
    %14 = arith.sitofp %13 : vector<128x128xi32> to vector<128x128xf32>
    %15 = arith.truncf %14 : vector<128x128xf32> to vector<128x128xbf16>
    %c0_2 = arith.constant 0 : index
    %c0_3 = arith.constant 0 : index
    %16 = vector.load %arg6[%c0_2, %c0_3] : memref<128x128xf32, #tpu.memory_space<vmem>>, vector<128x128xf32>
    %c0_4 = arith.constant 0 : index
    %c0_5 = arith.constant 0 : index
    %17 = vector.load %arg3[%c0_4, %c0_5] : memref<128x128xbf16, #tpu.memory_space<vmem>>, vector<128x128xbf16>
    %cst = arith.constant dense<0.000000e+00> : vector<128x128xf32>
    %18 = tpu.matmul %17, %15, %cst {dimension_numbers = #tpu.dot_dimension_numbers<[1], [0], [0], [1], [0, 0, 1, 1], [], []>} : vector<128x128xbf16>, vector<128x128xbf16>, vector<128x128xf32> -> vector<128x128xf32>
    %19 = arith.addf %16, %18 : vector<128x128xf32>
    %c0_6 = arith.constant 0 : index
    %c0_7 = arith.constant 0 : index
    %20 = vector.load %arg6[%c0_6, %c0_7] : memref<128x128xf32, #tpu.memory_space<vmem>>, vector<128x128xf32>
    tpu.vector_store %arg6[%c0_6, %c0_7], %19 {strides = array<i32>} : memref<128x128xf32, #tpu.memory_space<vmem>>, vector<128x128xf32>,
    %c0_i32_8 = arith.constant 0 : i32
    %21 = arith.cmpi eq, %arg2, %c0_i32_8 : i32
    %22 = arith.extui %21 : i1 to i32
    %c0_i32_9 = arith.constant 0 : i32
    %23 = arith.cmpi ne, %22, %c0_i32_9 : i32
    scf.if %23 {
      %c0_10 = arith.constant 0 : index
      %c0_11 = arith.constant 0 : index
      %24 = vector.load %arg6[%c0_10, %c0_11] : memref<128x128xf32, #tpu.memory_space<vmem>>, vector<128x128xf32>
      %25 = arith.fptosi %24 : vector<128x128xf32> to vector<128x128xi32>
      %c0_12 = arith.constant 0 : index
      %c0_13 = arith.constant 0 : index
      %26 = vector.load %arg5[%c0_12, %c0_13] : memref<128x128xi32, #tpu.memory_space<vmem>>, vector<128x128xi32>
      tpu.vector_store %arg5[%c0_12, %c0_13], %25 {strides = array<i32>} : memref<128x128xi32, #tpu.memory_space<vmem>>, vector<128x128xi32>,
    } else {
    }
    return
  }
  func.func @transform_0(%arg0: i32, %arg1: i32, %arg2: i32) -> (i32, i32) {
    %c0_i32 = arith.constant 0 : i32
    return %arg0, %arg2 : i32, i32
  }
  func.func @transform_1(%arg0: i32, %arg1: i32, %arg2: i32) -> (i32, i32) {
    %c0_i32 = arith.constant 0 : i32
    %c0_i32_0 = arith.constant 0 : i32
    %c0_i32_1 = arith.constant 0 : i32
    return %c0_i32, %c0_i32_0 : i32, i32
  }
  func.func @transform_2(%arg0: i32, %arg1: i32, %arg2: i32) -> (i32, i32) {
    %c0_i32 = arith.constant 0 : i32
    return %arg0, %arg1 : i32, i32
  }
}

</mosaic_0001>

<llo_original>
// kernel: tpu_custom_call.1
$region0: #{tpu_custom_call.1}
  #allocation0 [shape = 'u32[]', space=smem, size = 0x4, offset = 0x4, fixed_abs, tag = 'smem constant byte address 0x4 - core index']
  #allocation1 [shape = 'u32[144,128]{1,0:T(1,128)}', space=vmem, size = 0x12000, scoped, tag = 'internal scratch']
  %s0 = inlined_call_operand.hbm [shape: f32[128,128], index: 0, kind: input, shape index: {}]
  %s1 = inlined_call_operand.hbm [shape: s16[128,128], index: 1, kind: output, shape index: {}]
  %s2 = sld [smem:[#allocation0]]
  $region18: #{tpu_custom_call.1} parent=0
    _
  %s4 = ssub.s32 1, %s2
  %s5 = scalar_select 0, %s4, %s2
  $region1: #{tpu_custom_call.1} parent=0
    #allocation2 [shape = 'u8[65536]{0}', space=vmem, size = 0x10000, scoped, tag = 'input window, operand 0, single buffered']
    #allocation3 [shape = 's32[1]{0}', space=sflag, size = 0x4, scoped, tag = 'scoped memory for tpu_custom_call.1']
    #allocation4 [shape = 's32[1]{0}', space=sflag, size = 0x4, scoped, tag = 'scoped memory for tpu_custom_call.1']
    #allocation5 [shape = 'u8[32768]{0}', space=vmem, size = 0x8000, scoped, tag = 'output window, operand 0, single buffered']
    %6 = vsyncpa [#allocation3], 0
    %7 = vsyncpa [#allocation4], 0
    // Predicated region
    $region2: #{tpu_custom_call.1} parent=1 // pred_check
      _
    $region3: #{tpu_custom_call.1} parent=1 // pred_check_branch
      %9 = sbr.rel (0) target = $region5
    $region4: #{tpu_custom_call.1} parent=1 // pred_region
      %s11 = ssub.s32 2048, 2048
      %12 = vsyncadd [#allocation3], %s11
      %s13 = sshll.u32 [#allocation2], 4
      %s14 = int_to_ptr.vmem [resolvable:$true] %s13
      %19 = dma.hbm_to_vmem [thread:$0]  %s0, 2048, %s14, [#allocation3], 128, 128, 8
    $region5: #{tpu_custom_call.1} parent=1 // pred_fallthru
      _
    // Predicated region
    $region6: #{tpu_custom_call.1} parent=1 // pred_check
      _
    $region7: #{tpu_custom_call.1} parent=1 // pred_check_branch
      %21 = sbr.rel (0) target = $region9
    $region8: #{tpu_custom_call.1} parent=1 // pred_region
      %22 = dma.done [#allocation3], 2048
    $region9: #{tpu_custom_call.1} parent=1 // pred_fallthru
      _
    %v23 = vld [vmem:[#allocation2] sm:$0xff]
    %v24 = vld [vmem:[#allocation2 + $0x8] sm:$0xff]
    %v25 = vld [vmem:[#allocation2 + $0x10] sm:$0xff]
    %v26 = vld [vmem:[#allocation2 + $0x18] sm:$0xff]
    %v27 = vld [vmem:[#allocation2 + $0x20] sm:$0xff]
    %v28 = vld [vmem:[#allocation2 + $0x28] sm:$0xff]
    %v29 = vld [vmem:[#allocation2 + $0x30] sm:$0xff]
    %v30 = vld [vmem:[#allocation2 + $0x38] sm:$0xff]
    %v31 = vld [vmem:[#allocation2 + $0x40] sm:$0xff]
    %v32 = vld [vmem:[#allocation2 + $0x48] sm:$0xff]
    %v33 = vld [vmem:[#allocation2 + $0x50] sm:$0xff]
    %v34 = vld [vmem:[#allocation2 + $0x58] sm:$0xff]
    %v35 = vld [vmem:[#allocation2 + $0x60] sm:$0xff]
    %v36 = vld [vmem:[#allocation2 + $0x68] sm:$0xff]
    %v37 = vld [vmem:[#allocation2 + $0x70] sm:$0xff]
    %v38 = vld [vmem:[#allocation2 + $0x78] sm:$0xff]
    %v39 = vcvt.f32.s32.to.zero.pseudo %v23
    %v40 = vcvt.f32.s32.to.zero.pseudo %v24
    %v41 = vcvt.f32.s32.to.zero.pseudo %v25
    %v42 = vcvt.f32.s32.to.zero.pseudo %v26
    %v43 = vcvt.f32.s32.to.zero.pseudo %v27
    %v44 = vcvt.f32.s32.to.zero.pseudo %v28
    %v45 = vcvt.f32.s32.to.zero.pseudo %v29
    %v46 = vcvt.f32.s32.to.zero.pseudo %v30
    %v47 = vcvt.f32.s32.to.zero.pseudo %v31
    %v48 = vcvt.f32.s32.to.zero.pseudo %v32
    %v49 = vcvt.f32.s32.to.zero.pseudo %v33
    %v50 = vcvt.f32.s32.to.zero.pseudo %v34
    %v51 = vcvt.f32.s32.to.zero.pseudo %v35
    %v52 = vcvt.f32.s32.to.zero.pseudo %v36
    %v53 = vcvt.f32.s32.to.zero.pseudo %v37
    %v54 = vcvt.f32.s32.to.zero.pseudo %v38
    %v55 = vpack.c.b16 %v39, %v39
    %v56 = vpack.c.b16 %v40, %v40
    %v57 = vpack.c.b16 %v41, %v41
    %v58 = vpack.c.b16 %v42, %v42
    %v59 = vpack.c.b16 %v43, %v43
    %v60 = vpack.c.b16 %v44, %v44
    %v61 = vpack.c.b16 %v45, %v45
    %v62 = vpack.c.b16 %v46, %v46
    %v63 = vpack.c.b16 %v47, %v47
    %v64 = vpack.c.b16 %v48, %v48
    %v65 = vpack.c.b16 %v49, %v49
    %v66 = vpack.c.b16 %v50, %v50
    %v67 = vpack.c.b16 %v51, %v51
    %v68 = vpack.c.b16 %v52, %v52
    %v69 = vpack.c.b16 %v53, %v53
    %v70 = vpack.c.b16 %v54, %v54
    %71 = vst [vmem:[#allocation5] sm:$0xf] %v55
    %72 = vst [vmem:[#allocation5 + $0x4] sm:$0xf] %v56
    %73 = vst [vmem:[#allocation5 + $0x8] sm:$0xf] %v57
    %74 = vst [vmem:[#allocation5 + $0xc] sm:$0xf] %v58
    %75 = vst [vmem:[#allocation5 + $0x10] sm:$0xf] %v59
    %76 = vst [vmem:[#allocation5 + $0x14] sm:$0xf] %v60
    %77 = vst [vmem:[#allocation5 + $0x18] sm:$0xf] %v61
    %78 = vst [vmem:[#allocation5 + $0x1c] sm:$0xf] %v62
    %79 = vst [vmem:[#allocation5 + $0x20] sm:$0xf] %v63
    %80 = vst [vmem:[#allocation5 + $0x24] sm:$0xf] %v64
    %81 = vst [vmem:[#allocation5 + $0x28] sm:$0xf] %v65
    %82 = vst [vmem:[#allocation5 + $0x2c] sm:$0xf] %v66
    %83 = vst [vmem:[#allocation5 + $0x30] sm:$0xf] %v67
    %84 = vst [vmem:[#allocation5 + $0x34] sm:$0xf] %v68
    %85 = vst [vmem:[#allocation5 + $0x38] sm:$0xf] %v69
    %86 = vst [vmem:[#allocation5 + $0x3c] sm:$0xf] %v70
    // Predicated region
    $region10: #{tpu_custom_call.1} parent=1 // pred_check
      _
    $region11: #{tpu_custom_call.1} parent=1 // pred_check_branch
      %88 = sbr.rel (0) target = $region13
    $region12: #{tpu_custom_call.1} parent=1 // pred_region
      %s90 = ssub.s32 1024, 1024
      %91 = vsyncadd [#allocation4], %s90
      %s92 = sshll.u32 [#allocation5], 4
      %s93 = int_to_ptr.vmem [resolvable:$true] %s92
      %98 = dma.vmem_to_hbm [thread:$0]  %s93, 1024, %s1, [#allocation4], 64, 64, 4
    $region13: #{tpu_custom_call.1} parent=1 // pred_fallthru
      _
    // Predicated region
    $region14: #{tpu_custom_call.1} parent=1 // pred_check
      _
    $region15: #{tpu_custom_call.1} parent=1 // pred_check_branch
      %100 = sbr.rel (0) target = $region17
    $region16: #{tpu_custom_call.1} parent=1 // pred_region
      %101 = dma.done [#allocation4], 1024
    $region17: #{tpu_custom_call.1} parent=1 // pred_fallthru
      _
    %102 = vsyncpa [#allocation3], 1
    %103 = vsyncpa [#allocation4], 1

// kernel: tpu_custom_call.1
$region0: #{tpu_custom_call.1}
  #allocation0 [shape = 'u32[]', space=smem, size = 0x4, offset = 0x4, fixed_abs, tag = 'smem constant byte address 0x4 - core index']
  #allocation1 [shape = 'u32[144,128]{1,0:T(1,128)}', space=vmem, size = 0x12000, scoped, tag = 'internal scratch']
  #allocation2 [shape = 'f32[128,128]{1,0:T(8,128)}', space=vmem, size = 0x10000, scoped, tag = 'scratch operand']
  %s0 = inlined_call_operand.vmem [shape: bf16[128,128], index: 0, kind: input, shape index: {}]
  %s1 = inlined_call_operand.vmem [shape: s32[128,1], index: 1, kind: input, shape index: {}]
  %s2 = inlined_call_operand.hbm [shape: s32[128,128], index: 2, kind: output, shape index: {}]
  %s3 = sld [smem:[#allocation0]]
  $region26: #{tpu_custom_call.1} parent=0
    _
  %s5 = ssub.s32 1, %s3
  %s6 = scalar_select 0, %s5, %s3
  $region1: #{tpu_custom_call.1} parent=0
    #allocation3 [shape = 'u8[65536]{0}', space=vmem, size = 0x10000, scoped, tag = 'output window, operand 0, single buffered']
    #allocation4 [shape = 's32[1]{0}', space=sflag, size = 0x4, scoped, tag = 'scoped memory for tpu_custom_call.1']
    %7 = vsyncpa [#allocation4], 0
    // Predicated region
    $region2: #{tpu_custom_call.1} parent=1 // pred_check
      _
    $region3: #{tpu_custom_call.1} parent=1 // pred_check_branch
      %9 = sbr.rel (0) target = $region5
    $region4: #{tpu_custom_call.1} parent=1 // pred_region
      _
    $region5: #{tpu_custom_call.1} parent=1 // pred_fallthru
      _
    // Predicated region
    $region6: #{tpu_custom_call.1} parent=1 // pred_check
      _
    $region7: #{tpu_custom_call.1} parent=1 // pred_check_branch
      %11 = sbr.rel (0) target = $region9
    $region8: #{tpu_custom_call.1} parent=1 // pred_region
      _
    $region9: #{tpu_custom_call.1} parent=1 // pred_fallthru
      _
    %p13 = scmp.eq.s32.totalorder 0, 0
    // Predicated region
    $region10: #{tpu_custom_call.1} parent=1 // pred_check
      %p14 = pneg %p13
    $region11: #{tpu_custom_call.1} parent=1 // pred_check_branch
      %16 = sbr.rel (%p14) target = $region13
    $region12: #{tpu_custom_call.1} parent=1 // pred_region
      %17 = vst [vmem:[#allocation2] sm:$0xff] 0.0
      %18 = vst [vmem:[#allocation2 + $0x8] sm:$0xff] 0.0
      %19 = vst [vmem:[#allocation2 + $0x10] sm:$0xff] 0.0
      %20 = vst [vmem:[#allocation2 + $0x18] sm:$0xff] 0.0
      %21 = vst [vmem:[#allocation2 + $0x20] sm:$0xff] 0.0
      %22 = vst [vmem:[#allocation2 + $0x28] sm:$0xff] 0.0
      %23 = vst [vmem:[#allocation2 + $0x30] sm:$0xff] 0.0
      %24 = vst [vmem:[#allocation2 + $0x38] sm:$0xff] 0.0
      %25 = vst [vmem:[#allocation2 + $0x40] sm:$0xff] 0.0
      %26 = vst [vmem:[#allocation2 + $0x48] sm:$0xff] 0.0
      %27 = vst [vmem:[#allocation2 + $0x50] sm:$0xff] 0.0
      %28 = vst [vmem:[#allocation2 + $0x58] sm:$0xff] 0.0
      %29 = vst [vmem:[#allocation2 + $0x60] sm:$0xff] 0.0
      %30 = vst [vmem:[#allocation2 + $0x68] sm:$0xff] 0.0
      %31 = vst [vmem:[#allocation2 + $0x70] sm:$0xff] 0.0
      %32 = vst [vmem:[#allocation2 + $0x78] sm:$0xff] 0.0
    $region13: #{tpu_custom_call.1} parent=1 // pred_fallthru
      _
    %s33 = smul.u32 0, 128
    %s34 = smul.u32 0, 128
    %s35 = scalar_lea.vmem %s1, %s33
    %v36 = vld [vmem:[%s35] sm:$0xff]
    %v37 = vld [vmem:[%s35 + $0x8] sm:$0xff]
    %v38 = vld [vmem:[%s35 + $0x10] sm:$0xff]
    %v39 = vld [vmem:[%s35 + $0x18] sm:$0xff]
    %v40 = vld [vmem:[%s35 + $0x20] sm:$0xff]
    %v41 = vld [vmem:[%s35 + $0x28] sm:$0xff]
    %v42 = vld [vmem:[%s35 + $0x30] sm:$0xff]
    %v43 = vld [vmem:[%s35 + $0x38] sm:$0xff]
    %v44 = vld [vmem:[%s35 + $0x40] sm:$0xff]
    %v45 = vld [vmem:[%s35 + $0x48] sm:$0xff]
    %v46 = vld [vmem:[%s35 + $0x50] sm:$0xff]
    %v47 = vld [vmem:[%s35 + $0x58] sm:$0xff]
    %v48 = vld [vmem:[%s35 + $0x60] sm:$0xff]
    %v49 = vld [vmem:[%s35 + $0x68] sm:$0xff]
    %v50 = vld [vmem:[%s35 + $0x70] sm:$0xff]
    %v51 = vld [vmem:[%s35 + $0x78] sm:$0xff]
    %v52 = vstv %s34
    %v53 = vsub.s32 %v36, %v52
    %v54 = vsub.s32 %v37, %v52
    %v55 = vsub.s32 %v38, %v52
    %v56 = vsub.s32 %v39, %v52
    %v57 = vsub.s32 %v40, %v52
    %v58 = vsub.s32 %v41, %v52
    %v59 = vsub.s32 %v42, %v52
    %v60 = vsub.s32 %v43, %v52
    %v61 = vsub.s32 %v44, %v52
    %v62 = vsub.s32 %v45, %v52
    %v63 = vsub.s32 %v46, %v52
    %v64 = vsub.s32 %v47, %v52
    %v65 = vsub.s32 %v48, %v52
    %v66 = vsub.s32 %v49, %v52
    %v67 = vsub.s32 %v50, %v52
    %v68 = vsub.s32 %v51, %v52
    %v69 = vlaneseq
    %v70 = vand.u32 %v69, 127
    %71 = vset.pattern.permute.xlu0 0
    %72 = vperm.xlu0 %71, %v53
    %v73 = vpop.permute.xlu0 %72
    %74 = vset.pattern.permute.xlu0 0
    %75 = vperm.xlu0 %74, %v54
    %v76 = vpop.permute.xlu0 %75
    %77 = vset.pattern.permute.xlu0 0
    %78 = vperm.xlu0 %77, %v55
    %v79 = vpop.permute.xlu0 %78
    %80 = vset.pattern.permute.xlu0 0
    %81 = vperm.xlu0 %80, %v56
    %v82 = vpop.permute.xlu0 %81
    %83 = vset.pattern.permute.xlu0 0
    %84 = vperm.xlu0 %83, %v57
    %v85 = vpop.permute.xlu0 %84
    %86 = vset.pattern.permute.xlu0 0
    %87 = vperm.xlu0 %86, %v58
    %v88 = vpop.permute.xlu0 %87
    %89 = vset.pattern.permute.xlu0 0
    %90 = vperm.xlu0 %89, %v59
    %v91 = vpop.permute.xlu0 %90
    %92 = vset.pattern.permute.xlu0 0
    %93 = vperm.xlu0 %92, %v60
    %v94 = vpop.permute.xlu0 %93
    %95 = vset.pattern.permute.xlu0 0
    %96 = vperm.xlu0 %95, %v61
    %v97 = vpop.permute.xlu0 %96
    %98 = vset.pattern.permute.xlu0 0
    %99 = vperm.xlu0 %98, %v62
    %v100 = vpop.permute.xlu0 %99
    %101 = vset.pattern.permute.xlu0 0
    %102 = vperm.xlu0 %101, %v63
    %v103 = vpop.permute.xlu0 %102
    %104 = vset.pattern.permute.xlu0 0
    %105 = vperm.xlu0 %104, %v64
    %v106 = vpop.permute.xlu0 %105
    %107 = vset.pattern.permute.xlu0 0
    %108 = vperm.xlu0 %107, %v65
    %v109 = vpop.permute.xlu0 %108
    %110 = vset.pattern.permute.xlu0 0
    %111 = vperm.xlu0 %110, %v66
    %v112 = vpop.permute.xlu0 %111
    %113 = vset.pattern.permute.xlu0 0
    %114 = vperm.xlu0 %113, %v67
    %v115 = vpop.permute.xlu0 %114
    %116 = vset.pattern.permute.xlu0 0
    %117 = vperm.xlu0 %116, %v68
    %v118 = vpop.permute.xlu0 %117
    %vm119 = vcmp.eq.s32.totalorder %v73, %v70
    %vm120 = vcmp.eq.s32.totalorder %v76, %v70
    %vm121 = vcmp.eq.s32.totalorder %v79, %v70
    %vm122 = vcmp.eq.s32.totalorder %v82, %v70
    %vm123 = vcmp.eq.s32.totalorder %v85, %v70
    %vm124 = vcmp.eq.s32.totalorder %v88, %v70
    %vm125 = vcmp.eq.s32.totalorder %v91, %v70
    %vm126 = vcmp.eq.s32.totalorder %v94, %v70
    %vm127 = vcmp.eq.s32.totalorder %v97, %v70
    %vm128 = vcmp.eq.s32.totalorder %v100, %v70
    %vm129 = vcmp.eq.s32.totalorder %v103, %v70
    %vm130 = vcmp.eq.s32.totalorder %v106, %v70
    %vm131 = vcmp.eq.s32.totalorder %v109, %v70
    %vm132 = vcmp.eq.s32.totalorder %v112, %v70
    %vm133 = vcmp.eq.s32.totalorder %v115, %v70
    %vm134 = vcmp.eq.s32.totalorder %v118, %v70
    %v135 = vsel %vm119, 1, 0
    %v136 = vsel %vm120, 1, 0
    %v137 = vsel %vm121, 1, 0
    %v138 = vsel %vm122, 1, 0
    %v139 = vsel %vm123, 1, 0
    %v140 = vsel %vm124, 1, 0
    %v141 = vsel %vm125, 1, 0
    %v142 = vsel %vm126, 1, 0
    %v143 = vsel %vm127, 1, 0
    %v144 = vsel %vm128, 1, 0
    %v145 = vsel %vm129, 1, 0
    %v146 = vsel %vm130, 1, 0
    %v147 = vsel %vm131, 1, 0
    %v148 = vsel %vm132, 1, 0
    %v149 = vsel %vm133, 1, 0
    %v150 = vsel %vm134, 1, 0
    %v151 = vcvt.s32.f32 %v135
    %v152 = vcvt.s32.f32 %v136
    %v153 = vcvt.s32.f32 %v137
    %v154 = vcvt.s32.f32 %v138
    %v155 = vcvt.s32.f32 %v139
    %v156 = vcvt.s32.f32 %v140
    %v157 = vcvt.s32.f32 %v141
    %v158 = vcvt.s32.f32 %v142
    %v159 = vcvt.s32.f32 %v143
    %v160 = vcvt.s32.f32 %v144
    %v161 = vcvt.s32.f32 %v145
    %v162 = vcvt.s32.f32 %v146
    %v163 = vcvt.s32.f32 %v147
    %v164 = vcvt.s32.f32 %v148
    %v165 = vcvt.s32.f32 %v149
    %v166 = vcvt.s32.f32 %v150
    %v167 = vpack.c.bf16 %v152, %v151
    %v168 = vpack.c.bf16 %v154, %v153
    %v169 = vpack.c.bf16 %v156, %v155
    %v170 = vpack.c.bf16 %v158, %v157
    %v171 = vpack.c.bf16 %v160, %v159
    %v172 = vpack.c.bf16 %v162, %v161
    %v173 = vpack.c.bf16 %v164, %v163
    %v174 = vpack.c.bf16 %v166, %v165
    %v175 = vld [vmem:[#allocation2] sm:$0xff]
    %v176 = vld [vmem:[#allocation2 + $0x8] sm:$0xff]
    %v177 = vld [vmem:[#allocation2 + $0x10] sm:$0xff]
    %v178 = vld [vmem:[#allocation2 + $0x18] sm:$0xff]
    %v179 = vld [vmem:[#allocation2 + $0x20] sm:$0xff]
    %v180 = vld [vmem:[#allocation2 + $0x28] sm:$0xff]
    %v181 = vld [vmem:[#allocation2 + $0x30] sm:$0xff]
    %v182 = vld [vmem:[#allocation2 + $0x38] sm:$0xff]
    %v183 = vld [vmem:[#allocation2 + $0x40] sm:$0xff]
    %v184 = vld [vmem:[#allocation2 + $0x48] sm:$0xff]
    %v185 = vld [vmem:[#allocation2 + $0x50] sm:$0xff]
    %v186 = vld [vmem:[#allocation2 + $0x58] sm:$0xff]
    %v187 = vld [vmem:[#allocation2 + $0x60] sm:$0xff]
    %v188 = vld [vmem:[#allocation2 + $0x68] sm:$0xff]
    %v189 = vld [vmem:[#allocation2 + $0x70] sm:$0xff]
    %v190 = vld [vmem:[#allocation2 + $0x78] sm:$0xff]
    %v191 = vld [vmem:[%s0] sm:$0xf]
    %v192 = vld [vmem:[%s0 + $0x4] sm:$0xf]
    %v193 = vld [vmem:[%s0 + $0x8] sm:$0xf]
    %v194 = vld [vmem:[%s0 + $0xc] sm:$0xf]
    %v195 = vld [vmem:[%s0 + $0x10] sm:$0xf]
    %v196 = vld [vmem:[%s0 + $0x14] sm:$0xf]
    %v197 = vld [vmem:[%s0 + $0x18] sm:$0xf]
    %v198 = vld [vmem:[%s0 + $0x1c] sm:$0xf]
    %v199 = vld [vmem:[%s0 + $0x20] sm:$0xf]
    %v200 = vld [vmem:[%s0 + $0x24] sm:$0xf]
    %v201 = vld [vmem:[%s0 + $0x28] sm:$0xf]
    %v202 = vld [vmem:[%s0 + $0x2c] sm:$0xf]
    %v203 = vld [vmem:[%s0 + $0x30] sm:$0xf]
    %v204 = vld [vmem:[%s0 + $0x34] sm:$0xf]
    %v205 = vld [vmem:[%s0 + $0x38] sm:$0xf]
    %v206 = vld [vmem:[%s0 + $0x3c] sm:$0xf]
    %v223 = vunpack.c.l.b16 %v191
    %v224 = vunpack.c.l.b16 %v192
    %v225 = vunpack.c.l.b16 %v193
    %v226 = vunpack.c.l.b16 %v194
    %v227 = vunpack.c.l.b16 %v195
    %v228 = vunpack.c.l.b16 %v196
    %v229 = vunpack.c.l.b16 %v197
    %v230 = vunpack.c.l.b16 %v198
    %v231 = vunpack.c.l.b16 %v199
    %v232 = vunpack.c.l.b16 %v200
    %v233 = vunpack.c.l.b16 %v201
    %v234 = vunpack.c.l.b16 %v202
    %v235 = vunpack.c.l.b16 %v203
    %v236 = vunpack.c.l.b16 %v204
    %v237 = vunpack.c.l.b16 %v205
    %v238 = vunpack.c.l.b16 %v206
    %v239 = vpack.c.b16 %v224, %v223
    %v240 = vpack.c.b16 %v226, %v225
    %v241 = vpack.c.b16 %v228, %v227
    %v242 = vpack.c.b16 %v230, %v229
    %v243 = vpack.c.b16 %v232, %v231
    %v244 = vpack.c.b16 %v234, %v233
    %v245 = vpack.c.b16 %v236, %v235
    %v246 = vpack.c.b16 %v238, %v237
    %255 = vmatprep.subr.bf16.mxu0 0
    %256 = vmatpush1.bf16.msra.mxu0 %v167
    %257 = vmatprep.subr.bf16.mxu0 0
    %258 = vmatpush1.bf16.msra.mxu0 %v168
    %259 = vmatprep.subr.bf16.mxu0 0
    %260 = vmatpush1.bf16.msra.mxu0 %v169
    %261 = vmatprep.subr.bf16.mxu0 0
    %262 = vmatpush1.bf16.msra.mxu0 %v170
    %263 = vmatprep.subr.bf16.mxu0 0
    %264 = vmatpush1.bf16.msra.mxu0 %v171
    %265 = vmatprep.subr.bf16.mxu0 0
    %266 = vmatpush1.bf16.msra.mxu0 %v172
    %267 = vmatprep.subr.bf16.mxu0 0
    %268 = vmatpush1.bf16.msra.mxu0 %v173
    %269 = vmatprep.subr.bf16.mxu0 0
    %270 = vmatpush1.bf16.msra.mxu0 %v174
    %271 = vmatprep.subr.bf16.mxu0 0
    %272 = vmatpush1.bf16.msra.mxu0 0
    %273 = vmatprep.subr.bf16.mxu0 0
    %274 = vmatpush1.bf16.msra.mxu0 0
    %275 = vmatprep.subr.bf16.mxu0 0
    %276 = vmatpush1.bf16.msra.mxu0 0
    %277 = vmatprep.subr.bf16.mxu0 0
    %278 = vmatpush1.bf16.msra.mxu0 0
    %279 = vmatprep.subr.bf16.mxu0 0
    %280 = vmatpush1.bf16.msra.mxu0 0
    %281 = vmatprep.subr.bf16.mxu0 0
    %282 = vmatpush1.bf16.msra.mxu0 0
    %283 = vmatprep.subr.bf16.mxu0 0
    %284 = vmatpush1.bf16.msra.mxu0 0
    %285 = vmatprep.subr.bf16.mxu0 0
    %286 = vmatpush1.bf16.msra.mxu0 0
    %287 = vmatprep.mubr.bf16.mxu0 0
    %288 = vmatmul.mubr.bf16.gmra.mrb[0].mxu0 %v239
    %v289 = vpop.f32.mrb[0].mxu0
    %v290 = vadd.f32 0.0, %v289
    %v291 = vpop.f32.mrb[0].mxu0
    %v292 = vpop.f32.mrb[0].mxu0
    %v293 = vadd.f32 0.0, %v292
    %v294 = vpop.f32.mrb[0].mxu0
    %295 = vmatprep.mubr.bf16.mxu0 0
    %296 = vmatmul.mubr.bf16.gmra.mrb[0].mxu0 %v240
    %v297 = vpop.f32.mrb[0].mxu0
    %v298 = vadd.f32 0.0, %v297
    %v299 = vpop.f32.mrb[0].mxu0
    %v300 = vpop.f32.mrb[0].mxu0
    %v301 = vadd.f32 0.0, %v300
    %v302 = vpop.f32.mrb[0].mxu0
    %303 = vmatprep.mubr.bf16.mxu0 0
    %304 = vmatmul.mubr.bf16.gmra.mrb[0].mxu0 %v241
    %v305 = vpop.f32.mrb[0].mxu0
    %v306 = vadd.f32 0.0, %v305
    %v307 = vpop.f32.mrb[0].mxu0
    %v308 = vpop.f32.mrb[0].mxu0
    %v309 = vadd.f32 0.0, %v308
    %v310 = vpop.f32.mrb[0].mxu0
    %311 = vmatprep.mubr.bf16.mxu0 0
    %312 = vmatmul.mubr.bf16.gmra.mrb[0].mxu0 %v242
    %v313 = vpop.f32.mrb[0].mxu0
    %v314 = vadd.f32 0.0, %v313
    %v315 = vpop.f32.mrb[0].mxu0
    %v316 = vpop.f32.mrb[0].mxu0
    %v317 = vadd.f32 0.0, %v316
    %v318 = vpop.f32.mrb[0].mxu0
    %319 = vmatprep.mubr.bf16.mxu0 0
    %320 = vmatmul.mubr.bf16.gmra.mrb[0].mxu0 %v243
    %v321 = vpop.f32.mrb[0].mxu0
    %v322 = vadd.f32 0.0, %v321
    %v323 = vpop.f32.mrb[0].mxu0
    %v324 = vpop.f32.mrb[0].mxu0
    %v325 = vadd.f32 0.0, %v324
    %v326 = vpop.f32.mrb[0].mxu0
    %327 = vmatprep.mubr.bf16.mxu0 0
    %328 = vmatmul.mubr.bf16.gmra.mrb[0].mxu0 %v244
    %v329 = vpop.f32.mrb[0].mxu0
    %v330 = vadd.f32 0.0, %v329
    %v331 = vpop.f32.mrb[0].mxu0
    %v332 = vpop.f32.mrb[0].mxu0
    %v333 = vadd.f32 0.0, %v332
    %v334 = vpop.f32.mrb[0].mxu0
    %335 = vmatprep.mubr.bf16.mxu0 0
    %336 = vmatmul.mubr.bf16.gmra.mrb[0].mxu0 %v245
    %v337 = vpop.f32.mrb[0].mxu0
    %v338 = vadd.f32 0.0, %v337
    %v339 = vpop.f32.mrb[0].mxu0
    %v340 = vpop.f32.mrb[0].mxu0
    %v341 = vadd.f32 0.0, %v340
    %v342 = vpop.f32.mrb[0].mxu0
    %343 = vmatprep.mubr.bf16.mxu0 0
    %344 = vmatmul.mubr.bf16.gmra.mrb[0].mxu0 %v246
    %v345 = vpop.f32.mrb[0].mxu0
    %v346 = vadd.f32 0.0, %v345
    %v347 = vpop.f32.mrb[0].mxu0
    %v348 = vpop.f32.mrb[0].mxu0
    %v349 = vadd.f32 0.0, %v348
    %v350 = vpop.f32.mrb[0].mxu0
    %351 = vdwg.mxu0
    %v352 = vadd.f32 %v175, %v290
    %v353 = vadd.f32 %v176, %v293
    %v354 = vadd.f32 %v177, %v298
    %v355 = vadd.f32 %v178, %v301
    %v356 = vadd.f32 %v179, %v306
    %v357 = vadd.f32 %v180, %v309
    %v358 = vadd.f32 %v181, %v314
    %v359 = vadd.f32 %v182, %v317
    %v360 = vadd.f32 %v183, %v322
    %v361 = vadd.f32 %v184, %v325
    %v362 = vadd.f32 %v185, %v330
    %v363 = vadd.f32 %v186, %v333
    %v364 = vadd.f32 %v187, %v338
    %v365 = vadd.f32 %v188, %v341
    %v366 = vadd.f32 %v189, %v346
    %v367 = vadd.f32 %v190, %v349
    %368 = vst [vmem:[#allocation2] sm:$0xff] %v352
    %369 = vst [vmem:[#allocation2 + $0x8] sm:$0xff] %v353
    %370 = vst [vmem:[#allocation2 + $0x10] sm:$0xff] %v354
    %371 = vst [vmem:[#allocation2 + $0x18] sm:$0xff] %v355
    %372 = vst [vmem:[#allocation2 + $0x20] sm:$0xff] %v356
    %373 = vst [vmem:[#allocation2 + $0x28] sm:$0xff] %v357
    %374 = vst [vmem:[#allocation2 + $0x30] sm:$0xff] %v358
    %375 = vst [vmem:[#allocation2 + $0x38] sm:$0xff] %v359
    %376 = vst [vmem:[#allocation2 + $0x40] sm:$0xff] %v360
    %377 = vst [vmem:[#allocation2 + $0x48] sm:$0xff] %v361
    %378 = vst [vmem:[#allocation2 + $0x50] sm:$0xff] %v362
    %379 = vst [vmem:[#allocation2 + $0x58] sm:$0xff] %v363
    %380 = vst [vmem:[#allocation2 + $0x60] sm:$0xff] %v364
    %381 = vst [vmem:[#allocation2 + $0x68] sm:$0xff] %v365
    %382 = vst [vmem:[#allocation2 + $0x70] sm:$0xff] %v366
    %383 = vst [vmem:[#allocation2 + $0x78] sm:$0xff] %v367
    // Predicated region
    $region14: #{tpu_custom_call.1} parent=1 // pred_check
      %p384 = pneg %p13
    $region15: #{tpu_custom_call.1} parent=1 // pred_check_branch
      %386 = sbr.rel (%p384) target = $region17
    $region16: #{tpu_custom_call.1} parent=1 // pred_region
      %v387 = vld [vmem:[#allocation2] sm:$0xff]
      %v388 = vld [vmem:[#allocation2 + $0x8] sm:$0xff]
      %v389 = vld [vmem:[#allocation2 + $0x10] sm:$0xff]
      %v390 = vld [vmem:[#allocation2 + $0x18] sm:$0xff]
      %v391 = vld [vmem:[#allocation2 + $0x20] sm:$0xff]
      %v392 = vld [vmem:[#allocation2 + $0x28] sm:$0xff]
      %v393 = vld [vmem:[#allocation2 + $0x30] sm:$0xff]
      %v394 = vld [vmem:[#allocation2 + $0x38] sm:$0xff]
      %v395 = vld [vmem:[#allocation2 + $0x40] sm:$0xff]
      %v396 = vld [vmem:[#allocation2 + $0x48] sm:$0xff]
      %v397 = vld [vmem:[#allocation2 + $0x50] sm:$0xff]
      %v398 = vld [vmem:[#allocation2 + $0x58] sm:$0xff]
      %v399 = vld [vmem:[#allocation2 + $0x60] sm:$0xff]
      %v400 = vld [vmem:[#allocation2 + $0x68] sm:$0xff]
      %v401 = vld [vmem:[#allocation2 + $0x70] sm:$0xff]
      %v402 = vld [vmem:[#allocation2 + $0x78] sm:$0xff]
      %v403 = vcvt.f32.s32.to.zero.pseudo %v387
      %v404 = vcvt.f32.s32.to.zero.pseudo %v388
      %v405 = vcvt.f32.s32.to.zero.pseudo %v389
      %v406 = vcvt.f32.s32.to.zero.pseudo %v390
      %v407 = vcvt.f32.s32.to.zero.pseudo %v391
      %v408 = vcvt.f32.s32.to.zero.pseudo %v392
      %v409 = vcvt.f32.s32.to.zero.pseudo %v393
      %v410 = vcvt.f32.s32.to.zero.pseudo %v394
      %v411 = vcvt.f32.s32.to.zero.pseudo %v395
      %v412 = vcvt.f32.s32.to.zero.pseudo %v396
      %v413 = vcvt.f32.s32.to.zero.pseudo %v397
      %v414 = vcvt.f32.s32.to.zero.pseudo %v398
      %v415 = vcvt.f32.s32.to.zero.pseudo %v399
      %v416 = vcvt.f32.s32.to.zero.pseudo %v400
      %v417 = vcvt.f32.s32.to.zero.pseudo %v401
      %v418 = vcvt.f32.s32.to.zero.pseudo %v402
      %419 = vst [vmem:[#allocation3] sm:$0xff] %v403
      %420 = vst [vmem:[#allocation3 + $0x8] sm:$0xff] %v404
      %421 = vst [vmem:[#allocation3 + $0x10] sm:$0xff] %v405
      %422 = vst [vmem:[#allocation3 + $0x18] sm:$0xff] %v406
      %423 = vst [vmem:[#allocation3 + $0x20] sm:$0xff] %v407
      %424 = vst [vmem:[#allocation3 + $0x28] sm:$0xff] %v408
      %425 = vst [vmem:[#allocation3 + $0x30] sm:$0xff] %v409
      %426 = vst [vmem:[#allocation3 + $0x38] sm:$0xff] %v410
      %427 = vst [vmem:[#allocation3 + $0x40] sm:$0xff] %v411
      %428 = vst [vmem:[#allocation3 + $0x48] sm:$0xff] %v412
      %429 = vst [vmem:[#allocation3 + $0x50] sm:$0xff] %v413
      %430 = vst [vmem:[#allocation3 + $0x58] sm:$0xff] %v414
      %431 = vst [vmem:[#allocation3 + $0x60] sm:$0xff] %v415
      %432 = vst [vmem:[#allocation3 + $0x68] sm:$0xff] %v416
      %433 = vst [vmem:[#allocation3 + $0x70] sm:$0xff] %v417
      %434 = vst [vmem:[#allocation3 + $0x78] sm:$0xff] %v418
    $region17: #{tpu_custom_call.1} parent=1 // pred_fallthru
      _
    // Predicated region
    $region18: #{tpu_custom_call.1} parent=1 // pred_check
      _
    $region19: #{tpu_custom_call.1} parent=1 // pred_check_branch
      %436 = sbr.rel (0) target = $region21
    $region20: #{tpu_custom_call.1} parent=1 // pred_region
      %s438 = ssub.s32 2048, 2048
      %439 = vsyncadd [#allocation4], %s438
      %s440 = sshll.u32 [#allocation3], 4
      %s441 = int_to_ptr.vmem [resolvable:$true] %s440
      %446 = dma.vmem_to_hbm [thread:$0]  %s441, 2048, %s2, [#allocation4], 128, 128, 8
    $region21: #{tpu_custom_call.1} parent=1 // pred_fallthru
      _
    // Predicated region
    $region22: #{tpu_custom_call.1} parent=1 // pred_check
      _
    $region23: #{tpu_custom_call.1} parent=1 // pred_check_branch
      %448 = sbr.rel (0) target = $region25
    $region24: #{tpu_custom_call.1} parent=1 // pred_region
      %449 = dma.done [#allocation4], 2048
    $region25: #{tpu_custom_call.1} parent=1 // pred_fallthru
      _
    %450 = vsyncpa [#allocation4], 1

</llo_original>
